<compile_context>
chip_gen: v7x
topology: tpu7x:2x2x1
jax: 0.10.0
libtpu: 0.0.40
codegen_flags: <defaults>
</compile_context>

<pallas_src>
import functools

import numpy as np
import jax
import jax.numpy as jnp
from jax.experimental import pallas as pl
from jax.experimental.pallas import tpu as pltpu

# MXU operand dtype.  Set to jnp.bfloat16 for ~2x MXU throughput / half the HBM traffic
# at production sizes (accumulation stays f32).  Kept f32 here so the small-shape
# numeric check against the pure-JAX reference stays tight.
_MXU_DTYPE = jnp.float32


def _pick_tile(dim, preferred):
    """Largest preferred tile dividing `dim`, else the full dim (keeps the (8,128)
    block constraint satisfied either way)."""
    for t in preferred:
        if dim % t == 0:
            return t
    return dim


# ---------------------------------------------------------------------------
# Kernel 1: fused LayerNorm + stacked Linear (+ optional ReLU)
#   x:(M,K)   w:(P,K,N) pre-transposed   b:(P,1,N)   ->   out:(P,M,N)
#   grid = (M//TM, P, N//TN); K (= d_model) kept whole so LN sees the full row.
# ---------------------------------------------------------------------------
def _ln_linear_kernel(x_ref, w_ref, b_ref, o_ref, *, ln_alpha, ln_beta, eps, relu):
    x = x_ref[...].astype(jnp.float32)                      # (TM, K)
    k_dim = x.shape[-1]
    mean = jnp.mean(x, axis=-1, keepdims=True)
    xc = x - mean
    # torch.Tensor.std default is unbiased: divide by (K - 1).
    var = jnp.sum(xc * xc, axis=-1, keepdims=True) / (k_dim - 1)
    xn = ln_alpha * xc / (jnp.sqrt(var) + eps) + ln_beta
    y = jnp.dot(xn.astype(_MXU_DTYPE), w_ref[0].astype(_MXU_DTYPE),
                preferred_element_type=jnp.float32)
    y = y + b_ref[0]
    if relu:
        y = jnp.maximum(y, 0.0)
    o_ref[0] = y.astype(o_ref.dtype)


def ln_linear(x2d, w_stacked, b_stacked, *, ln_alpha, ln_beta, eps, relu=False):
    M, K = x2d.shape
    P, _, N = w_stacked.shape
    TM = _pick_tile(M, (512, 256, 128))
    TN = _pick_tile(N, (512, 256, 128))
    kernel = functools.partial(_ln_linear_kernel, ln_alpha=ln_alpha,
                               ln_beta=ln_beta, eps=eps, relu=relu)
    return pl.pallas_call(
        kernel,
        out_shape=jax.ShapeDtypeStruct((P, M, N), jnp.float32),
        grid=(M // TM, P, N // TN),
        in_specs=[
            pl.BlockSpec((TM, K), lambda i, p, j: (i, 0)),
            pl.BlockSpec((1, K, TN), lambda i, p, j: (p, 0, j)),
            pl.BlockSpec((1, 1, TN), lambda i, p, j: (p, 0, j)),
        ],
        out_specs=pl.BlockSpec((1, TM, TN), lambda i, p, j: (p, i, j)),
        compiler_params=pltpu.CompilerParams(
            dimension_semantics=("parallel", "parallel", "parallel")),
    )(x2d, w_stacked, b_stacked)


# ---------------------------------------------------------------------------
# Kernel 2: flash-style multi-head attention (all heads per grid step)
#   qkv:(3,B,S,D)   mask:(B,1,S,S)   ->   out:(B,S,D)
#   grid = (B, S//TQ, S//TK), KV axis last ("arbitrary"), online softmax scratch.
# ---------------------------------------------------------------------------
def _flash_attn_kernel(q_ref, k_ref, v_ref, mask_ref, o_ref,
                       m_sc, l_sc, acc_sc, *, num_heads, d_k, scale):
    kv_i = pl.program_id(2)

    @pl.when(kv_i == 0)
    def _init():
        m_sc[...] = jnp.full(m_sc.shape, -jnp.inf, dtype=m_sc.dtype)
        l_sc[...] = jnp.zeros(l_sc.shape, dtype=l_sc.dtype)
        acc_sc[...] = jnp.zeros(acc_sc.shape, dtype=acc_sc.dtype)

    tq = q_ref.shape[2]
    tk = k_ref.shape[2]

    # Fold 1/sqrt(d_k) into Q once (cheaper than scaling the (TQ,TK) scores).
    q = (q_ref[0, 0].astype(jnp.float32) * scale).reshape(tq, num_heads, d_k)
    k = k_ref[0, 0].reshape(tk, num_heads, d_k)
    v = v_ref[0, 0].reshape(tk, num_heads, d_k)
    mask = mask_ref[0, 0]                                   # (tq, tk)

    s = jnp.einsum("qhd,khd->hqk", q.astype(_MXU_DTYPE), k.astype(_MXU_DTYPE),
                   preferred_element_type=jnp.float32)      # (h, tq, tk), f32
    s = jnp.where(mask[None, :, :] == 0, jnp.float32(-1e9), s)

    m_prev = m_sc[...]                                      # (h, tq, 1)
    m_new = jnp.maximum(m_prev, jnp.max(s, axis=-1, keepdims=True))
    alpha = jnp.exp(m_prev - m_new)                         # (h, tq, 1)
    p = jnp.exp(s - m_new)                                  # (h, tq, tk)

    l_sc[...] = alpha * l_sc[...] + jnp.sum(p, axis=-1, keepdims=True)
    pv = jnp.einsum("hqk,khd->hqd", p.astype(_MXU_DTYPE), v.astype(_MXU_DTYPE),
                    preferred_element_type=jnp.float32)     # (h, tq, d_k)
    acc_sc[...] = alpha * acc_sc[...] + pv
    m_sc[...] = m_new

    @pl.when(kv_i == pl.num_programs(2) - 1)
    def _finalize():
        inv_l = pl.reciprocal(l_sc[...], approx=True)       # EUP slot
        out = acc_sc[...] * inv_l                           # (h, tq, d_k)
        out = jnp.transpose(out, (1, 0, 2)).reshape(tq, num_heads * d_k)
        o_ref[0] = out.astype(o_ref.dtype)                  # lane-dense (TQ, D)


def flash_attention(qkv, mask, num_heads):
    _, B, S, D = qkv.shape
    d_k = D // num_heads
    TQ = _pick_tile(S, (256, 128))
    TK = _pick_tile(S, (512, 256, 128))
    scale = 1.0 / float(np.sqrt(d_k))
    kernel = functools.partial(_flash_attn_kernel, num_heads=num_heads,
                               d_k=d_k, scale=scale)
    return pl.pallas_call(
        kernel,
        out_shape=jax.ShapeDtypeStruct((B, S, D), jnp.float32),
        grid=(B, S // TQ, S // TK),
        in_specs=[
            pl.BlockSpec((1, 1, TQ, D), lambda b, qi, ki: (0, b, qi, 0)),   # Q slice
            pl.BlockSpec((1, 1, TK, D), lambda b, qi, ki: (1, b, ki, 0)),   # K slice
            pl.BlockSpec((1, 1, TK, D), lambda b, qi, ki: (2, b, ki, 0)),   # V slice
            pl.BlockSpec((1, 1, TQ, TK), lambda b, qi, ki: (b, 0, qi, ki)), # mask
        ],
        out_specs=pl.BlockSpec((1, TQ, D), lambda b, qi, ki: (b, qi, 0)),
        scratch_shapes=[
            pltpu.VMEM((num_heads, TQ, 1), jnp.float32),     # running max m
            pltpu.VMEM((num_heads, TQ, 1), jnp.float32),     # running sum l
            pltpu.VMEM((num_heads, TQ, d_k), jnp.float32),   # output accumulator
        ],
        compiler_params=pltpu.CompilerParams(
            dimension_semantics=("parallel", "parallel", "arbitrary")),
    )(qkv, qkv, qkv, mask)


# ---------------------------------------------------------------------------
# Kernel 3: tiled Linear with fused bias + residual add
#   x:(M,K)   w:(K,N) pre-transposed   b:(1,N)   res:(M,N)   ->   out:(M,N)
#   grid = (M//TM, N//TN, K//TK), f32 VMEM accumulator, K axis "arbitrary".
# ---------------------------------------------------------------------------
def _linear_residual_kernel(x_ref, w_ref, b_ref, res_ref, o_ref, acc_ref):
    kk = pl.program_id(2)

    @pl.when(kk == 0)
    def _init():
        acc_ref[...] = jnp.zeros(acc_ref.shape, dtype=acc_ref.dtype)

    acc_ref[...] += jnp.dot(x_ref[...].astype(_MXU_DTYPE),
                            w_ref[...].astype(_MXU_DTYPE),
                            preferred_element_type=jnp.float32)

    @pl.when(kk == pl.num_programs(2) - 1)
    def _finalize():
        y = acc_ref[...] + b_ref[...] + res_ref[...].astype(jnp.float32)
        o_ref[...] = y.astype(o_ref.dtype)


def linear_residual(x2d, w_t, b, res2d):
    M, K = x2d.shape
    _, N = w_t.shape
    TM = _pick_tile(M, (512, 256, 128))
    TN = _pick_tile(N, (512, 256, 128))
    TK = _pick_tile(K, (512, 256, 128))
    return pl.pallas_call(
        _linear_residual_kernel,
        out_shape=jax.ShapeDtypeStruct((M, N), jnp.float32),
        grid=(M // TM, N // TN, K // TK),
        in_specs=[
            pl.BlockSpec((TM, TK), lambda i, j, kk: (i, kk)),
            pl.BlockSpec((TK, TN), lambda i, j, kk: (kk, j)),
            pl.BlockSpec((1, TN), lambda i, j, kk: (0, j)),
            pl.BlockSpec((TM, TN), lambda i, j, kk: (i, j)),
        ],
        out_specs=pl.BlockSpec((TM, TN), lambda i, j, kk: (i, j)),
        scratch_shapes=[pltpu.VMEM((TM, TN), jnp.float32)],
        compiler_params=pltpu.CompilerParams(
            dimension_semantics=("parallel", "parallel", "arbitrary")),
    )(x2d, w_t, b, res2d)


# ---------------------------------------------------------------------------
# EncoderBlock wrapper
# ---------------------------------------------------------------------------
class EncoderBlockPallas:
    def __init__(self, d_model: int, h: int, d_ff: int, key, eps: float = 1e-6):
        assert d_model % h == 0
        self.d_model, self.h, self.d_k, self.d_ff, self.eps = d_model, h, d_model // h, d_ff, eps
        # LayerNormalization params (one per ResidualConnection), torch init: ones/zeros.
        self.ln1_alpha, self.ln1_beta = 1.0, 0.0
        self.ln2_alpha, self.ln2_beta = 1.0, 0.0

        keys = jax.random.split(key, 12)

        def mk(kw, shape, fan_in):
            bound = 1.0 / np.sqrt(fan_in)
            return jax.random.uniform(kw, shape, jnp.float32, -bound, bound)

        # torch nn.Linear layout: W (out, in), y = x @ W.T + b
        self.w_q, self.b_q = mk(keys[0], (d_model, d_model), d_model), mk(keys[1], (d_model,), d_model)
        self.w_k, self.b_k = mk(keys[2], (d_model, d_model), d_model), mk(keys[3], (d_model,), d_model)
        self.w_v, self.b_v = mk(keys[4], (d_model, d_model), d_model), mk(keys[5], (d_model,), d_model)
        self.w_o, self.b_o = mk(keys[6], (d_model, d_model), d_model), mk(keys[7], (d_model,), d_model)
        self.w1, self.b1 = mk(keys[8], (d_ff, d_model), d_model), mk(keys[9], (d_ff,), d_model)
        self.w2, self.b2 = mk(keys[10], (d_model, d_ff), d_ff), mk(keys[11], (d_model,), d_ff)

        # Kernel layouts: pre-transposed / stacked on the host (one-time cost).
        self.w_qkv = jnp.stack([self.w_q.T, self.w_k.T, self.w_v.T])        # (3, D, D)
        self.b_qkv = jnp.stack([self.b_q, self.b_k, self.b_v]).reshape(3, 1, d_model)
        self.w_o_t = self.w_o.T                                             # (D, D)
        self.b_o_2 = self.b_o.reshape(1, d_model)
        self.w1_t = self.w1.T.reshape(1, d_model, d_ff)                     # (1, D, d_ff)
        self.b1_2 = self.b1.reshape(1, 1, d_ff)
        self.w2_t = self.w2.T                                               # (d_ff, D)
        self.b2_2 = self.b2.reshape(1, d_model)

    def __call__(self, x, src_mask):
        B, S, D = x.shape
        M = B * S
        x2d = x.reshape(M, D)

        # ---- Sublayer 1: pre-norm self-attention + residual ----
        qkv = ln_linear(x2d, self.w_qkv, self.b_qkv,
                        ln_alpha=self.ln1_alpha, ln_beta=self.ln1_beta, eps=self.eps)
        qkv = qkv.reshape(3, B, S, D)                       # free contiguous reshape
        attn = flash_attention(qkv, src_mask, self.h)       # (B, S, D), lane-dense
        x1 = linear_residual(attn.reshape(M, D), self.w_o_t, self.b_o_2, x2d)

        # ---- Sublayer 2: pre-norm feed-forward + residual ----
        h1 = ln_linear(x1, self.w1_t, self.b1_2,
                       ln_alpha=self.ln2_alpha, ln_beta=self.ln2_beta, eps=self.eps,
                       relu=True)
        h1 = h1.reshape(M, self.d_ff)
        out = linear_residual(h1, self.w2_t, self.b2_2, x1)
        return out.reshape(B, S, D)


# ---------------------------------------------------------------------------
# Pure-JAX reference (mirrors the PyTorch module, eval mode)
# ---------------------------------------------------------------------------
def reference_encoder_block(blk, x, mask):
    def ln(t, alpha, beta):
        mean = t.mean(-1, keepdims=True)
        std = jnp.std(t, axis=-1, ddof=1, keepdims=True)    # torch std: unbiased
        return alpha * (t - mean) / (std + blk.eps) + beta

    B, S, D = x.shape
    xn = ln(x, blk.ln1_alpha, blk.ln1_beta)
    q = xn @ blk.w_q.T + blk.b_q
    k = xn @ blk.w_k.T + blk.b_k
    v = xn @ blk.w_v.T + blk.b_v

    def split(t):
        return t.reshape(B, S, blk.h, blk.d_k).transpose(0, 2, 1, 3)

    qh, kh, vh = split(q), split(k), split(v)
    scores = jnp.einsum("bhqd,bhkd->bhqk", qh, kh) / np.sqrt(blk.d_k)
    scores = jnp.where(mask == 0, -1e9, scores)
    probs = jax.nn.softmax(scores, axis=-1)
    attn = jnp.einsum("bhqk,bhkd->bhqd", probs, vh)
    attn = attn.transpose(0, 2, 1, 3).reshape(B, S, D)
    x1 = x + (attn @ blk.w_o.T + blk.b_o)

    xn2 = ln(x1, blk.ln2_alpha, blk.ln2_beta)
    h1 = jnp.maximum(xn2 @ blk.w1.T + blk.b1, 0.0)
    return x1 + (h1 @ blk.w2.T + blk.b2)


# ---------------------------------------------------------------------------
if __name__ == "__main__":
    B, S, d_model, h, d_ff = 2, 8, 32, 4, 64

    root = jax.random.PRNGKey(0)
    k_params, k_x = jax.random.split(root, 2)

    block = EncoderBlockPallas(d_model, h, d_ff, k_params)

    x = jax.random.normal(k_x, (B, S, d_model), jnp.float32)
    # src_mask: (B, 1, S, S), 1 = keep, 0 = masked (broadcast over heads).
    causal = jnp.tril(jnp.ones((S, S), jnp.int32))
    src_mask = jnp.broadcast_to(causal, (B, 1, S, S))

    out = block(x, src_mask)
    out = jax.block_until_ready(out)

    ref = reference_encoder_block(block, x, src_mask)
    np.testing.assert_allclose(np.asarray(out), np.asarray(ref), atol=5e-3, rtol=5e-3)

    print("KERNEL_OK")
</pallas_src>

<mosaic_0001>
module attributes {stable_mosaic.version = 11 : i64} {
  func.func @_ln_linear_kernel(%arg0: i32, %arg1: i32, %arg2: i32, %arg3: memref<16x32xf32, #tpu.memory_space<vmem>>, %arg4: memref<1x32x32xf32, #tpu.memory_space<vmem>>, %arg5: memref<1x1x32xf32, #tpu.memory_space<vmem>>, %arg6: memref<1x16x32xf32, #tpu.memory_space<vmem>>) attributes {dimension_semantics = [#tpu.dimension_semantics<parallel>, #tpu.dimension_semantics<parallel>, #tpu.dimension_semantics<parallel>], iteration_bounds = array<i64: 1, 3, 1>, scalar_prefetch = 0 : i64, scratch_operands = 0 : i64, tpu.core_type = #tpu.core_type<tc>, window_params = [{transform_indices = @transform_0, window_bounds = array<i64: 16, 32>}, {transform_indices = @transform_1, window_bounds = array<i64: 1, 32, 32>}, {transform_indices = @transform_2, window_bounds = array<i64: 1, 1, 32>}, {transform_indices = @transform_3, window_bounds = array<i64: 1, 16, 32>}]} {
    %c0 = arith.constant 0 : index
    %c0_0 = arith.constant 0 : index
    %0 = vector.load %arg3[%c0, %c0_0] : memref<16x32xf32, #tpu.memory_space<vmem>>, vector<16x32xf32>
    %cst = arith.constant dense<0.000000e+00> : vector<16xf32>
    %1 = vector.multi_reduction <add>, %0, %cst [1] : vector<16x32xf32> to vector<16xf32>
    %2 = vector.shape_cast %1 : vector<16xf32> to vector<16x1xf32>
    %cst_1 = arith.constant 3.200000e+01 : f32
    %3 = vector.broadcast %cst_1 : f32 to vector<16x1xf32>
    %4 = arith.divf %2, %3 : vector<16x1xf32>
    %5 = vector.broadcast %4 : vector<16x1xf32> to vector<16x32xf32>
    %6 = arith.subf %0, %5 : vector<16x32xf32>
    %7 = arith.mulf %6, %6 : vector<16x32xf32>
    %cst_2 = arith.constant dense<0.000000e+00> : vector<16xf32>
    %8 = vector.multi_reduction <add>, %7, %cst_2 [1] : vector<16x32xf32> to vector<16xf32>
    %9 = vector.shape_cast %8 : vector<16xf32> to vector<16x1xf32>
    %cst_3 = arith.constant 3.100000e+01 : f32
    %10 = vector.broadcast %cst_3 : f32 to vector<16x1xf32>
    %11 = arith.divf %9, %10 : vector<16x1xf32>
    %cst_4 = arith.constant 1.000000e+00 : f32
    %12 = vector.broadcast %cst_4 : f32 to vector<16x32xf32>
    %13 = arith.mulf %12, %6 : vector<16x32xf32>
    %14 = math.sqrt %11 : vector<16x1xf32>
    %cst_5 = arith.constant 9.99999997E-7 : f32
    %15 = vector.broadcast %cst_5 : f32 to vector<16x1xf32>
    %16 = arith.addf %14, %15 : vector<16x1xf32>
    %17 = vector.broadcast %16 : vector<16x1xf32> to vector<16x32xf32>
    %18 = arith.divf %13, %17 : vector<16x32xf32>
    %cst_6 = arith.constant 0.000000e+00 : f32
    %19 = vector.broadcast %cst_6 : f32 to vector<16x32xf32>
    %20 = arith.addf %18, %19 : vector<16x32xf32>
    %c0_7 = arith.constant 0 : index
    %c0_8 = arith.constant 0 : index
    %c0_9 = arith.constant 0 : index
    %21 = vector.load %arg4[%c0_7, %c0_8, %c0_9] : memref<1x32x32xf32, #tpu.memory_space<vmem>>, vector<1x32x32xf32>
    %22 = vector.shape_cast %21 : vector<1x32x32xf32> to vector<32x32xf32>
    %cst_10 = arith.constant dense<0.000000e+00> : vector<16x32xf32>
    %23 = tpu.matmul %20, %22, %cst_10 {dimension_numbers = #tpu.dot_dimension_numbers<[1], [0], [0], [1], [0, 0, 1, 1], [], []>} : vector<16x32xf32>, vector<32x32xf32>, vector<16x32xf32> -> vector<16x32xf32>
    %c0_11 = arith.constant 0 : index
    %c0_12 = arith.constant 0 : index
    %c0_13 = arith.constant 0 : index
    %24 = vector.load %arg5[%c0_11, %c0_12, %c0_13] : memref<1x1x32xf32, #tpu.memory_space<vmem>>, vector<1x1x32xf32>
    %25 = vector.shape_cast %24 : vector<1x1x32xf32> to vector<1x32xf32>
    %26 = vector.broadcast %25 : vector<1x32xf32> to vector<16x32xf32>
    %27 = arith.addf %23, %26 : vector<16x32xf32>
    %c0_14 = arith.constant 0 : index
    %c0_15 = arith.constant 0 : index
    %c0_16 = arith.constant 0 : index
    %28 = vector.load %arg6[%c0_14, %c0_15, %c0_16] : memref<1x16x32xf32, #tpu.memory_space<vmem>>, vector<1x16x32xf32>
    %29 = vector.shape_cast %28 : vector<1x16x32xf32> to vector<16x32xf32>
    %30 = vector.shape_cast %27 : vector<16x32xf32> to vector<1x16x32xf32>
    tpu.vector_store %arg6[%c0_14, %c0_15, %c0_16], %30 {strides = array<i32>} : memref<1x16x32xf32, #tpu.memory_space<vmem>>, vector<1x16x32xf32>,
    return
  }
  func.func @transform_0(%arg0: i32, %arg1: i32, %arg2: i32) -> (i32, i32) {
    %c0_i32 = arith.constant 0 : i32
    %c0_i32_0 = arith.constant 0 : i32
    return %arg0, %c0_i32 : i32, i32
  }
  func.func @transform_1(%arg0: i32, %arg1: i32, %arg2: i32) -> (i32, i32, i32) {
    %c0_i32 = arith.constant 0 : i32
    %c0_i32_0 = arith.constant 0 : i32
    return %arg1, %c0_i32, %arg2 : i32, i32, i32
  }
  func.func @transform_2(%arg0: i32, %arg1: i32, %arg2: i32) -> (i32, i32, i32) {
    %c0_i32 = arith.constant 0 : i32
    %c0_i32_0 = arith.constant 0 : i32
    return %arg1, %c0_i32, %arg2 : i32, i32, i32
  }
  func.func @transform_3(%arg0: i32, %arg1: i32, %arg2: i32) -> (i32, i32, i32) {
    %c0_i32 = arith.constant 0 : i32
    return %arg1, %arg0, %arg2 : i32, i32, i32
  }
}

</mosaic_0001>

<llo_original>
// kernel: tpu_custom_call.1
$region0: #{tpu_custom_call.1}
  #allocation0 [shape = 'u32[]', space=smem, size = 0x4, offset = 0x4, fixed_abs, tag = 'smem constant byte address 0x4 - core index']
  #allocation1 [shape = 'u32[144,128]{1,0:T(1,128)}', space=vmem, size = 0x12000, scoped, tag = 'internal scratch']
  %s0 = inlined_call_operand.hbm [shape: f32[16,32], index: 0, kind: input, shape index: {}]
  %s1 = inlined_call_operand.hbm [shape: f32[3,32,32], index: 1, kind: input, shape index: {}]
  %s2 = inlined_call_operand.vmem [shape: f32[3,1,32], index: 2, kind: input, shape index: {}]
  %s3 = inlined_call_operand.hbm [shape: f32[3,16,32], index: 3, kind: output, shape index: {}]
  %s4 = sld [smem:[#allocation0]]
  $region53: #{tpu_custom_call.1} parent=0
    _
  %s6 = ssub.s32 1, %s4
  %s7 = scalar_select 0, %s6, %s4
  $region1: #{tpu_custom_call.1} parent=0
    #allocation2 [shape = 'u8[8192]{0}', space=vmem, size = 0x2000, scoped, tag = 'input window, operand 0, single buffered']
    #allocation3 [shape = 's32[2]{0}', space=sflag, size = 0x8, scoped, tag = 'scoped memory for tpu_custom_call.1']
    #allocation4 [shape = 's32[2]{0}', space=sflag, size = 0x8, scoped, tag = 'scoped memory for tpu_custom_call.1']
    #allocation5 [shape = 'u8[32768]{0}', space=vmem, size = 0x8000, scoped, tag = 'input window, operand 1']
    #allocation6 [shape = 's32[2]{0}', space=sflag, size = 0x8, scoped, tag = 'scoped memory for tpu_custom_call.1']
    #allocation7 [shape = 'u8[16384]{0}', space=vmem, size = 0x4000, scoped, tag = 'output window, operand 0']
    %8 = vsyncpa [#allocation3], 0
    %9 = vsyncpa [#allocation6], 0
    %s10 = scalar_lea.sflag [#allocation6], 1
    %11 = vsyncpa %s10, 0
    %12 = vsyncpa [#allocation4], 0
    %s13 = scalar_lea.sflag [#allocation4], 1
    %14 = vsyncpa %s13, 0
    loop: start=0, step=1, limit=5
    $region2: #{tpu_custom_call.1} parent=1 // loop_pre_header
      _
    $region3: #{tpu_custom_call.1} parent=1 // loop_header
      %s16 = sphi 0, %s20
      %p17 = scmp.ge.s32.totalorder %s16, 5
      %s23 = sphi 0, %s42
      %s24 = sphi 0, %s38
      %s25 = sphi 0, %s34
      %s26 = sphi 0, %s23
      %s27 = sphi 0, %s24
      %s28 = sphi 0, %s25
      %s29 = sphi 0, %s26
      %s30 = sphi 0, %s27
      %s31 = sphi 0, %s28
      %s45 = sphi 0, %s47
      %s48 = sphi 0, %s45
      %s49 = sphi 0, %s48
      %s65 = sphi 0, %s49
      %s73 = sphi 0, %s75
      %s76 = sphi 0, %s73
      %s77 = sphi 0, %s76
      %s93 = sphi 0, %s77
      %s101 = sphi 0, %s103
      %s104 = sphi 0, %s101
      %s105 = sphi 0, %s104
      %s121 = sphi 0, %s105
      %s131 = sphi 0, %s133
      %s134 = sphi 0, %s131
      %s135 = sphi 0, %s134
      %s151 = sphi 0, %s135
    $region4: #{tpu_custom_call.1} parent=1 // loop_header_branch
      %19 = sbr.rel (%p17) target = $region8
    $region5: #{tpu_custom_call.1} parent=1 // loop_body
      %s21 = ssub.s32 %s16, 1
      %s22 = ssub.s32 %s16, 2
      %s32 = sadd.s32 1, %s25
      %p33 = scmp.ge.s32.totalorder %s32, 1
      %s34 = scalar_select %p33, 0, %s32
      %s35 = sadd.s32 1, %s24
      %s36 = scalar_select %p33, %s35, %s24
      %p37 = scmp.ge.s32.totalorder %s36, 3
      %s38 = scalar_select %p37, 0, %s36
      %s39 = sadd.s32 1, %s23
      %s40 = scalar_select %p37, %s39, %s23
      %p41 = scmp.ge.s32.totalorder %s40, 1
      %s42 = scalar_select %p41, 0, %s40
      %s43 = ssub.s32 %s23, %s42
      %p44 = scmp.eq.s32.totalorder %s43, 0
      %s46 = sadd.s32 %s45, 1
      %s47 = scalar_select %p44, %s45, %s46
      %p50 = pneg %p44
      %p51 = scmp.eq.s32.totalorder %s16, 2
      %p52 = por %p50, %p51
      %p53 = scmp.ne.s32.totalorder %s45, %s48
      %p54 = scmp.eq.s32.totalorder %s16, 0
      %p55 = por %p53, %p54
      %p56 = scmp.ne.s32.totalorder %s45, %s48
      %p57 = scmp.eq.s32.totalorder %s21, 2
      %p58 = por %p56, %p57
      %p59 = scmp.ne.s32.totalorder %s48, %s49
      %p60 = scmp.eq.s32.totalorder %s21, 0
      %p61 = por %p59, %p60
      %p62 = scmp.ne.s32.totalorder %s48, %s49
      %p63 = scmp.eq.s32.totalorder %s22, 2
      %p64 = por %p62, %p63
      %p66 = scmp.ne.s32.totalorder %s49, %s65
      %p67 = scmp.eq.s32.totalorder %s22, 0
      %p68 = por %p66, %p67
      %s69 = ssub.s32 %s24, %s38
      %s70 = ssub.s32 %s25, %s34
      %s71 = sor.u32 %s69, %s70
      %p72 = scmp.eq.s32.totalorder %s71, 0
      %s74 = sadd.s32 %s73, 1
      %s75 = scalar_select %p72, %s73, %s74
      %p78 = pneg %p72
      %p79 = scmp.eq.s32.totalorder %s16, 2
      %p80 = por %p78, %p79
      %p81 = scmp.ne.s32.totalorder %s73, %s76
      %p82 = scmp.eq.s32.totalorder %s16, 0
      %p83 = por %p81, %p82
      %p84 = scmp.ne.s32.totalorder %s73, %s76
      %p85 = scmp.eq.s32.totalorder %s21, 2
      %p86 = por %p84, %p85
      %p87 = scmp.ne.s32.totalorder %s76, %s77
      %p88 = scmp.eq.s32.totalorder %s21, 0
      %p89 = por %p87, %p88
      %p90 = scmp.ne.s32.totalorder %s76, %s77
      %p91 = scmp.eq.s32.totalorder %s22, 2
      %p92 = por %p90, %p91
      %p94 = scmp.ne.s32.totalorder %s77, %s93
      %p95 = scmp.eq.s32.totalorder %s22, 0
      %p96 = por %p94, %p95
      %s97 = ssub.s32 %s24, %s38
      %s98 = ssub.s32 %s25, %s34
      %s99 = sor.u32 %s97, %s98
      %p100 = scmp.eq.s32.totalorder %s99, 0
      %s102 = sadd.s32 %s101, 1
      %s103 = scalar_select %p100, %s101, %s102
      %p106 = pneg %p100
      %p107 = scmp.eq.s32.totalorder %s16, 2
      %p108 = por %p106, %p107
      %p109 = scmp.ne.s32.totalorder %s101, %s104
      %p110 = scmp.eq.s32.totalorder %s16, 0
      %p111 = por %p109, %p110
      %p112 = scmp.ne.s32.totalorder %s101, %s104
      %p113 = scmp.eq.s32.totalorder %s21, 2
      %p114 = por %p112, %p113
      %p115 = scmp.ne.s32.totalorder %s104, %s105
      %p116 = scmp.eq.s32.totalorder %s21, 0
      %p117 = por %p115, %p116
      %p118 = scmp.ne.s32.totalorder %s104, %s105
      %p119 = scmp.eq.s32.totalorder %s22, 2
      %p120 = por %p118, %p119
      %p122 = scmp.ne.s32.totalorder %s105, %s121
      %p123 = scmp.eq.s32.totalorder %s22, 0
      %p124 = por %p122, %p123
      %s125 = ssub.s32 %s24, %s38
      %s126 = ssub.s32 %s23, %s42
      %s127 = sor.u32 %s125, %s126
      %s128 = ssub.s32 %s25, %s34
      %s129 = sor.u32 %s127, %s128
      %p130 = scmp.eq.s32.totalorder %s129, 0
      %s132 = sadd.s32 %s131, 1
      %s133 = scalar_select %p130, %s131, %s132
      %p136 = pneg %p130
      %p137 = scmp.eq.s32.totalorder %s16, 2
      %p138 = por %p136, %p137
      %p139 = scmp.ne.s32.totalorder %s131, %s134
      %p140 = scmp.eq.s32.totalorder %s16, 0
      %p141 = por %p139, %p140
      %p142 = scmp.ne.s32.totalorder %s131, %s134
      %p143 = scmp.eq.s32.totalorder %s21, 2
      %p144 = por %p142, %p143
      %p145 = scmp.ne.s32.totalorder %s134, %s135
      %p146 = scmp.eq.s32.totalorder %s21, 0
      %p147 = por %p145, %p146
      %p148 = scmp.ne.s32.totalorder %s134, %s135
      %p149 = scmp.eq.s32.totalorder %s22, 2
      %p150 = por %p148, %p149
      %p152 = scmp.ne.s32.totalorder %s135, %s151
      %p153 = scmp.eq.s32.totalorder %s22, 0
      %p154 = por %p152, %p153
      %p155 = scmp.le.s32.totalorder 1, %s16
      %p156 = scmp.lt.s32.totalorder %s16, 4
      %p157 = pnand %p155, %p156
      %p158 = pneg %p157
      // Predicated region
      $region9: #{tpu_custom_call.1} parent=5 // pred_check
        _
      $region10: #{tpu_custom_call.1} parent=5 // pred_check_branch
        %160 = sbr.rel (%p157) target = $region12
      $region11: #{tpu_custom_call.1} parent=5 // pred_region
        %s161 = ssub.s32 %s16, 1
        // Predicated region
        $region13: #{tpu_custom_call.1} parent=11 // pred_check
          %p162 = pneg %p61
        $region14: #{tpu_custom_call.1} parent=11 // pred_check_branch
          %164 = sbr.rel (%p162) target = $region16
        $region15: #{tpu_custom_call.1} parent=11 // pred_region
          %s165 = smul.u32 2, %s26
          %s167 = ssub.s32 256, 256
          %168 = vsyncadd [#allocation3], %s167
          %s169 = smul.addr %s165, 128
          %s170 = scalar_lea.hbm %s0, %s169
          %s171 = sshll.u32 [#allocation2], 4
          %s172 = int_to_ptr.vmem [resolvable:$true] %s171
          %177 = dma.hbm_to_vmem [thread:$0]  %s170, 256, %s172, [#allocation3], 128, 128, 8
        $region16: #{tpu_custom_call.1} parent=11 // pred_fallthru
          _
      $region12: #{tpu_custom_call.1} parent=5 // pred_fallthru
        _
      %p178 = scmp.lt.s32.totalorder %s16, 3
      // Predicated region
      $region17: #{tpu_custom_call.1} parent=5 // pred_check
        %p179 = pneg %p178
      $region18: #{tpu_custom_call.1} parent=5 // pred_check_branch
        %181 = sbr.rel (%p179) target = $region20
      $region19: #{tpu_custom_call.1} parent=5 // pred_region
        // Predicated region
        $region21: #{tpu_custom_call.1} parent=19 // pred_check
          %p182 = pneg %p83
        $region22: #{tpu_custom_call.1} parent=19 // pred_check_branch
          %184 = sbr.rel (%p182) target = $region24
        $region23: #{tpu_custom_call.1} parent=19 // pred_region
          %s185 = sand.u32 %s73, 1
          %s186 = scalar_lea.sflag [#allocation6], %s185
          %s187 = sand.u32 %s73, 1
          %s188 = smul.addr %s187, 32
          %s189 = scalar_lea.vmem [#allocation5], %s188
          %s191 = ssub.s32 512, 512
          %192 = vsyncadd %s186, %s191
          %s193 = smul.addr %s24, 4
          %s194 = sadd.s32 %s25, %s193
          %s195 = smul.addr %s194, 128
          %s196 = scalar_lea.hbm %s1, %s195
          %s197 = sshll.u32 %s189, 4
          %s198 = int_to_ptr.vmem [resolvable:$true] %s197
          %203 = dma.hbm_to_vmem [thread:$0]  %s196, 512, %s198, %s186, 128, 128, 8
        $region24: #{tpu_custom_call.1} parent=19 // pred_fallthru
          _
        // Predicated region
        $region25: #{tpu_custom_call.1} parent=19 // pred_check
          %p204 = pneg %p111
        $region26: #{tpu_custom_call.1} parent=19 // pred_check_branch
          %206 = sbr.rel (%p204) target = $region28
        $region27: #{tpu_custom_call.1} parent=19 // pred_region
          %p207 = scmp.lt.s32.totalorder %s24, 2
          %s208 = scalar_select %p207, %s24, 2
          %p209 = scmp.lt.s32.totalorder %s25, 0
          %s210 = scalar_select %p209, %s25, 0
          %s211 = sadd.s32 %s210, %s208
          %s212 = scalar_lea.vmem %s2, %s211
        $region28: #{tpu_custom_call.1} parent=19 // pred_fallthru
          _
      $region20: #{tpu_custom_call.1} parent=5 // pred_fallthru
        _
      %p213 = scmp.le.s32.totalorder 1, %s16
      %p214 = scmp.lt.s32.totalorder %s16, 4
      %p215 = pnand %p213, %p214
      %p216 = pneg %p215
      // Predicated region
      $region29: #{tpu_custom_call.1} parent=5 // pred_check
        _
      $region30: #{tpu_custom_call.1} parent=5 // pred_check_branch
        %218 = sbr.rel (%p215) target = $region32
      $region31: #{tpu_custom_call.1} parent=5 // pred_region
        %s219 = ssub.s32 %s16, 1
        // Predicated region
        $region33: #{tpu_custom_call.1} parent=31 // pred_check
          %p220 = pneg %p61
        $region34: #{tpu_custom_call.1} parent=31 // pred_check_branch
          %222 = sbr.rel (%p220) target = $region36
        $region35: #{tpu_custom_call.1} parent=31 // pred_region
          %223 = dma.done [#allocation3], 256
        $region36: #{tpu_custom_call.1} parent=31 // pred_fallthru
          _
        %s224 = sand.u32 %s76, 1
        %s225 = scalar_lea.sflag [#allocation6], %s224
        %s226 = sand.u32 %s76, 1
        %s227 = smul.addr %s226, 32
        %s228 = scalar_lea.vmem [#allocation5], %s227
        // Predicated region
        $region37: #{tpu_custom_call.1} parent=31 // pred_check
          %p229 = pneg %p89
        $region38: #{tpu_custom_call.1} parent=31 // pred_check_branch
          %231 = sbr.rel (%p229) target = $region40
        $region39: #{tpu_custom_call.1} parent=31 // pred_region
          %232 = dma.done %s225, 512
        $region40: #{tpu_custom_call.1} parent=31 // pred_fallthru
          _
        %p233 = pneg %p61
        %p234 = pneg %p58
        %s235 = sand.u32 %s76, 1
        %s236 = scalar_lea.sflag [#allocation6], %s235
        %s237 = sand.u32 %s76, 1
        %s238 = smul.addr %s237, 32
        %s239 = scalar_lea.vmem [#allocation5], %s238
        %p240 = pneg %p89
        %p241 = pneg %p86
        %p242 = scmp.lt.s32.totalorder %s27, 2
        %s243 = scalar_select %p242, %s27, 2
        %p244 = scmp.lt.s32.totalorder %s28, 0
        %s245 = scalar_select %p244, %s28, 0
        %s246 = sadd.s32 %s245, %s243
        %s247 = scalar_lea.vmem %s2, %s246
        %p248 = pneg %p117
        %p249 = pneg %p114
        %p250 = pneg %p147
        %p251 = pneg %p144
        %s252 = sand.u32 %s134, 1
        %s253 = scalar_lea.sflag [#allocation4], %s252
        %s254 = sand.u32 %s134, 1
        %s255 = smul.addr %s254, 16
        %s256 = scalar_lea.vmem [#allocation7], %s255
        %s257 = smul.u32 2, %s26
        %p258 = scmp.lt.s32.totalorder %s27, 2
        %s259 = scalar_select %p258, %s27, 2
        %p260 = scmp.lt.s32.totalorder %s28, 0
        %s261 = scalar_select %p260, %s28, 0
        %s262 = sadd.s32 %s261, %s259
        %s263 = scalar_lea.vmem %s2, %s262
        %s264 = smul.u32 2, %s26
        %v265 = vld [vmem:[#allocation2] sm:$0xff]
        %v266 = vld [vmem:[#allocation2 + $0x8] sm:$0xff]
        %vm267 = vcmask 261120
        %v268 = vsel %vm267, %v265, 0.0
        %269 = vadd.xlane.f32.xlu0 %v268
        %v270 = vpop.xlane.xlu0 %269
        %v271 = vsel %vm267, %v266, 0.0
        %272 = vadd.xlane.f32.xlu0 %v271
        %v273 = vpop.xlane.xlu0 %272
        %v274 = vrcp.pop 32.0
        %v275 = vmul.f32 %v270, %v274
        %v276 = vmul.f32 %v273, %v274
        %v277 = vsub.f32 %v265, %v275
        %v278 = vsub.f32 %v266, %v276
        %v279 = vmul.f32 %v277, %v277
        %v280 = vmul.f32 %v278, %v278
        %v281 = vsel %vm267, %v279, 0.0
        %282 = vadd.xlane.f32.xlu0 %v281
        %v283 = vpop.xlane.xlu0 %282
        %v284 = vsel %vm267, %v280, 0.0
        %285 = vadd.xlane.f32.xlu0 %v284
        %v286 = vpop.xlane.xlu0 %285
        %v287 = vrcp.pop 31.0
        %v288 = vmul.f32 %v283, %v287
        %v289 = vmul.f32 %v286, %v287
        %v290 = vrsqrt.pop %v288
        %v291 = vmul.f32 %v288, %v290
        %vm292 = vcmp.eq.f32.partialorder %v288, inf
        %v293 = vsel %vm292, %v288, %v291
        %vm294 = vcmp.eq.f32.partialorder %v288, 0.0
        %v295 = vand.u32 %v288, 2147483648
        %v296 = vsel %vm294, %v295, %v293
        %v297 = vrsqrt.pop %v289
        %v298 = vmul.f32 %v289, %v297
        %vm299 = vcmp.eq.f32.partialorder %v289, inf
        %v300 = vsel %vm299, %v289, %v298
        %vm301 = vcmp.eq.f32.partialorder %v289, 0.0
        %v302 = vand.u32 %v289, 2147483648
        %v303 = vsel %vm301, %v302, %v300
        %v304 = vadd.f32 %v296, 1e-06
        %v305 = vadd.f32 %v303, 1e-06
        %v306 = vrcp.pop %v304
        %v307 = vmul.f32 %v277, %v306
        %v308 = vrcp.pop %v305
        %v309 = vmul.f32 %v278, %v308
        %v310 = vadd.f32 %v307, 0.0
        %v311 = vadd.f32 %v309, 0.0
        %v312 = vld [vmem:[%s228] sm:$0xff]
        %v313 = vld [vmem:[%s228 + $0x8] sm:$0xff]
        %v314 = vld [vmem:[%s228 + $0x10] sm:$0xff]
        %v315 = vld [vmem:[%s228 + $0x18] sm:$0xff]
        %v316 = vld [vmem:[%s263] sm:$0x1]
        %v318 = vlaneseq
        %v319 = vshrl.u32 %v318, 7
        %v320 = vsub.s32 0, %v319
        %v321 = vrot.slane %v316, %v320
        %v324 = vsel %vm267, %v310, 0
        %v327 = vsel %vm267, %v311, 0
        %329 = vmatprep.subr.mxu0 0.0
        %330 = vmatpush1.msra.mxu0 %v312
        %331 = vmatprep.subr.mxu0 0.0
        %332 = vmatpush1.msra.mxu0 %v313
        %333 = vmatprep.subr.mxu0 0.0
        %334 = vmatpush1.msra.mxu0 %v314
        %335 = vmatprep.subr.mxu0 0.0
        %336 = vmatpush1.msra.mxu0 %v315
        %337 = vmatprep.subr.mxu0 0.0
        %338 = vmatpush1.msra.mxu0 0.0
        %339 = vmatprep.subr.mxu0 0.0
        %340 = vmatpush1.msra.mxu0 0.0
        %341 = vmatprep.subr.mxu0 0.0
        %342 = vmatpush1.msra.mxu0 0.0
        %343 = vmatprep.subr.mxu0 0.0
        %344 = vmatpush1.msra.mxu0 0.0
        %345 = vmatprep.subr.mxu0 0.0
        %346 = vmatpush1.msra.mxu0 0.0
        %347 = vmatprep.subr.mxu0 0.0
        %348 = vmatpush1.msra.mxu0 0.0
        %349 = vmatprep.subr.mxu0 0.0
        %350 = vmatpush1.msra.mxu0 0.0
        %351 = vmatprep.subr.mxu0 0.0
        %352 = vmatpush1.msra.mxu0 0.0
        %353 = vmatprep.subr.mxu0 0.0
        %354 = vmatpush1.msra.mxu0 0.0
        %355 = vmatprep.subr.mxu0 0.0
        %356 = vmatpush1.msra.mxu0 0.0
        %357 = vmatprep.subr.mxu0 0.0
        %358 = vmatpush1.msra.mxu0 0.0
        %359 = vmatprep.subr.mxu0 0.0
        %360 = vmatpush1.msra.mxu0 0.0
        %361 = vmatprep.subr.mxu0 0.0
        %362 = vmatpush1.msra.mxu0 0.0
        %363 = vmatprep.subr.mxu0 0.0
        %364 = vmatpush1.msra.mxu0 0.0
        %365 = vmatprep.subr.mxu0 0.0
        %366 = vmatpush1.msra.mxu0 0.0
        %367 = vmatprep.subr.mxu0 0.0
        %368 = vmatpush1.msra.mxu0 0.0
        %369 = vmatprep.subr.mxu0 0.0
        %370 = vmatpush1.msra.mxu0 0.0
        %371 = vmatprep.subr.mxu0 0.0
        %372 = vmatpush1.msra.mxu0 0.0
        %373 = vmatprep.subr.mxu0 0.0
        %374 = vmatpush1.msra.mxu0 0.0
        %375 = vmatprep.subr.mxu0 0.0
        %376 = vmatpush1.msra.mxu0 0.0
        %377 = vmatprep.subr.mxu0 0.0
        %378 = vmatpush1.msra.mxu0 0.0
        %379 = vmatprep.subr.mxu0 0.0
        %380 = vmatpush1.msra.mxu0 0.0
        %381 = vmatprep.subr.mxu0 0.0
        %382 = vmatpush1.msra.mxu0 0.0
        %383 = vmatprep.subr.mxu0 0.0
        %384 = vmatpush1.msra.mxu0 0.0
        %385 = vmatprep.subr.mxu0 0.0
        %386 = vmatpush1.msra.mxu0 0.0
        %387 = vmatprep.subr.mxu0 0.0
        %388 = vmatpush1.msra.mxu0 0.0
        %389 = vmatprep.subr.mxu0 0.0
        %390 = vmatpush1.msra.mxu0 0.0
        %391 = vmatprep.subr.mxu0 0.0
        %392 = vmatpush1.msra.mxu0 0.0
        %393 = vmatprep.mubr.f32.mxu0 0.0
        %394 = vmatmul.mubr.f32.gmra.mrb[0].mxu0 %v324
        %v395 = vpop.f32.mrb[0].mxu0
        %v396 = vadd.f32 %v321, %v395
        %v397 = vpop.f32.mrb[0].mxu0
        %398 = vmatprep.mubr.f32.mxu0 0.0
        %399 = vmatmul.mubr.f32.gmra.mrb[0].mxu0 %v327
        %v400 = vpop.f32.mrb[0].mxu0
        %v401 = vadd.f32 %v321, %v400
        %v402 = vpop.f32.mrb[0].mxu0
        %403 = vdwg.mxu0
        %404 = vst.msk [vmem:[%s256] sm:$0xff] %vm267, %v396
        %405 = vst.msk [vmem:[%s256 + $0x8] sm:$0xff] %vm267, %v401
        %s406 = sand.u32 %s134, 1
        %s407 = scalar_lea.sflag [#allocation4], %s406
        %s408 = sand.u32 %s134, 1
        %s409 = smul.addr %s408, 16
        %s410 = scalar_lea.vmem [#allocation7], %s409
        // Predicated region
        $region41: #{tpu_custom_call.1} parent=31 // pred_check
          %p411 = pneg %p144
        $region42: #{tpu_custom_call.1} parent=31 // pred_check_branch
          %413 = sbr.rel (%p411) target = $region44
        $region43: #{tpu_custom_call.1} parent=31 // pred_region
          %s414 = smul.u32 2, %s26
          %s416 = ssub.s32 256, 256
          %417 = vsyncadd %s407, %s416
          %s418 = sadd.s32 %s28, %s414
          %s419 = smul.addr %s27, 2
          %s420 = sadd.s32 %s418, %s419
          %s421 = smul.addr %s420, 128
          %s422 = scalar_lea.hbm %s3, %s421
          %s423 = sshll.u32 %s410, 4
          %s424 = int_to_ptr.vmem [resolvable:$true] %s423
          %429 = dma.vmem_to_hbm [thread:$0]  %s424, 256, %s422, %s407, 128, 128, 8
        $region44: #{tpu_custom_call.1} parent=31 // pred_fallthru
          _
      $region32: #{tpu_custom_call.1} parent=5 // pred_fallthru
        _
      %p430 = scmp.le.s32.totalorder 2, %s16
      // Predicated region
      $region45: #{tpu_custom_call.1} parent=5 // pred_check
        %p431 = pneg %p430
      $region46: #{tpu_custom_call.1} parent=5 // pred_check_branch
        %433 = sbr.rel (%p431) target = $region48
      $region47: #{tpu_custom_call.1} parent=5 // pred_region
        %s434 = ssub.s32 %s16, 2
        // Predicated region
        $region49: #{tpu_custom_call.1} parent=47 // pred_check
          %p435 = pneg %p150
        $region50: #{tpu_custom_call.1} parent=47 // pred_check_branch
          %437 = sbr.rel (%p435) target = $region52
        $region51: #{tpu_custom_call.1} parent=47 // pred_region
          %s438 = sand.u32 %s135, 1
          %s439 = scalar_lea.sflag [#allocation4], %s438
          %s440 = sand.u32 %s135, 1
          %s441 = smul.addr %s440, 16
          %s442 = scalar_lea.vmem [#allocation7], %s441
          %443 = dma.done %s439, 256
        $region52: #{tpu_custom_call.1} parent=47 // pred_fallthru
          _
      $region48: #{tpu_custom_call.1} parent=5 // pred_fallthru
        _
    $region6: #{tpu_custom_call.1} parent=1 // loop_footer
      %s20 = sadd.s32 1, %s16
    $region7: #{tpu_custom_call.1} parent=1 // loop_footer_branch
      %15 = sbr.rel target = $region3
    $region8: #{tpu_custom_call.1} parent=1 // loop_exit
      _
    %444 = vsyncpa [#allocation3], 1
    %s445 = scalar_lea.sflag [#allocation3], 1
    %446 = vsyncpa %s445, 1
    %447 = vsyncpa [#allocation6], 1
    %s448 = scalar_lea.sflag [#allocation6], 1
    %449 = vsyncpa %s448, 1
    %450 = vsyncpa [#allocation4], 1
    %s451 = scalar_lea.sflag [#allocation4], 1
    %452 = vsyncpa %s451, 1

</llo_original>
